<compile_context>
chip_gen: v5e
topology: v5e:2x2
jax: 0.10.0
libtpu: 0.0.40
codegen_flags: <defaults>
</compile_context>

<pallas_src>
import functools
import math

import jax
import jax.numpy as jnp
from jax.experimental import pallas as pl
from jax.experimental.pallas import tpu as pltpu

_LANE = 128
_SUBLANE = 8

# Set to False automatically if pl.Buffered(1) is unsupported on this jax version.
_BUFFERED_WEIGHTS_OK = [True]


def _round_up(n, m):
    return ((n + m - 1) // m) * m


def _vmem_capacity_bytes():
    try:
        return int(pltpu.get_tpu_info().vmem_capacity_bytes)
    except Exception:
        return 64 * 1024 * 1024  # v7x per-core floor; conservative everywhere else


def kolmogorov_bias_kernel(x_ref, w1t_ref, mat_ref, b1_ref, w2_ref, b2_ref, out_ref, *,
                           scale, eps, log_eps, use_gram, mxu_dtype):
    x = x_ref[...]                                   # (TB, D)
    if x.dtype != mxu_dtype:
        x = x.astype(mxu_dtype)                      # in-VMEM cast: no extra HBM traffic

    # Hidden layer on the MXU with f32 accumulation; all elementwise math stays f32
    # (v5e-safe: its VPU/EUP have no bf16 path).
    z1 = jnp.dot(x, w1t_ref[...], preferred_element_type=jnp.float32) + b1_ref[...]
    h = jnp.tanh(z1)                                 # (TB, Hp) f32

    w2 = w2_ref[...]                                 # (1, Hp) f32

    # Output layer is 1-wide: VPU multiply + lane reduce, not a degenerate MXU matmul.
    # All per-row scalars are kept lane-dense as (1, TB) rows from here on.
    z2 = jnp.sum(h * w2, axis=-1)[None, :] + b2_ref[...]          # (1, TB)
    q = jax.nn.sigmoid(z2)                                         # (1, TB)
    dq = q * (1.0 - q)                                             # (1, TB)

    t = w2 * (1.0 - h * h)                                         # (TB, Hp) f32
    tm = t if t.dtype == mat_ref.dtype else t.astype(mat_ref.dtype)
    if use_gram:
        # mat = G = W1 @ W1^T (Hp, Hp):  ||grad_pre||^2 = sum((t @ G) * t)
        tg = jnp.dot(tm, mat_ref[...], preferred_element_type=jnp.float32)   # (TB, Hp)
        s = jnp.sum(tg * t, axis=-1)[None, :]                                # (1, TB)
    else:
        # mat = W1 (Hp, D):  u = t @ W1,  ||grad_pre||^2 = sum(u*u)
        u = jnp.dot(tm, mat_ref[...], preferred_element_type=jnp.float32)    # (TB, D)
        s = jnp.sum(u * u, axis=-1)[None, :]                                 # (1, TB)

    s = jnp.maximum(s, 0.0)                          # rounding guard before the log
    gsq = (dq * dq) * s                              # (1, TB)
    # Lane-dense, unmasked store of one bias row per grid step.
    out_ref[...] = scale * (jnp.log(gsq + eps) - log_eps)


def kolmogorov_bias(x, w1, b1, w2, b2, *, beta, lambd=1.0, epsilon=1e-6,
                    block_batch=1024, matmul_dtype=None):
    """Kolmogorov bias of a 1-hidden-layer committor MLP.

    x: (B, D); w1: (H, D); b1: (H,); w2: (1, H); b2: (1,).
    block_batch: max rows per grid step (rounded to 128, capped by VMEM and so that
                 >= 2 grid steps exist when B allows — keeps both v7x TensorCores busy).
    matmul_dtype: MXU operand dtype (e.g. jnp.bfloat16; fine on v5e/v6e/v7x — their MXUs
                 are natively bf16). x is NEVER cast in the wrapper: pass x already in
                 bf16 to actually halve its HBM read, otherwise the cast happens in-VMEM.
                 All elementwise math (tanh/sigmoid/square/log) stays f32.
    """
    x = jnp.asarray(x)
    if x.dtype not in (jnp.float32, jnp.bfloat16):
        x = x.astype(jnp.float32)
    B, D = x.shape

    # ---- host-side weight prep (tiny, one-time) ----
    w1 = jnp.asarray(w1, jnp.float32)                # (H, D)
    H = w1.shape[0]
    Hp = _round_up(H, _LANE)                         # lane-align hidden dim (exact: zeros)
    if Hp != H:
        w1 = jnp.pad(w1, ((0, Hp - H), (0, 0)))
    b1p = jnp.zeros((1, Hp), jnp.float32).at[0, :H].set(
        jnp.asarray(b1, jnp.float32).reshape(H))
    w2p = jnp.zeros((1, Hp), jnp.float32).at[0, :H].set(
        jnp.asarray(w2, jnp.float32).reshape(H))
    b2p = jnp.asarray(b2, jnp.float32).reshape(1, 1)

    use_gram = D > Hp
    w1t = w1.T                                       # (D, Hp): x @ W1^T lane-dense
    mat = (w1 @ w1.T) if use_gram else w1            # (Hp, Hp) Gram  or  (Hp, D)

    if matmul_dtype is not None:
        mxu_dtype = matmul_dtype
    elif x.dtype == jnp.bfloat16:
        mxu_dtype = jnp.bfloat16
    else:
        mxu_dtype = jnp.float32
    w1t = w1t.astype(mxu_dtype)
    mat = mat.astype(mxu_dtype)

    x_item = x.dtype.itemsize
    w_item = w1t.dtype.itemsize

    # ---- batch-tile sizing from the chip's VMEM budget ----
    def est_vmem(tb):
        xb = 2 * tb * D * x_item                                   # double-buffered x tile
        ob = 2 * tb * 4                                            # double-buffered out row
        wb = 2 * (D * Hp + mat.shape[0] * mat.shape[1]) * w_item \
            + 2 * (2 * Hp + 1) * 4                                 # weights (worst case 2x)
        live = 4 * tb * max(Hp, mat.shape[1]) * 4                  # h / t / tg(u) f32 + slack
        return xb + ob + wb + live

    capacity = _vmem_capacity_bytes()
    budget = capacity // 2                                         # compiler headroom

    if B <= _LANE:
        TB = B                                                     # single exact tile
    else:
        TB = _round_up(max(_LANE, min(block_batch, B)), _LANE)     # lane-dense output rows
        TB = min(TB, _round_up(pl.cdiv(B, 2), _LANE))              # >= 2 grid steps (v7x TCs)
        while TB > _LANE and est_vmem(TB) > budget:
            TB = max(_LANE, _round_up(TB // 2, _LANE))
    NT = pl.cdiv(B, TB)
    vmem_limit = int(min(capacity, max(2 * est_vmem(TB), 32 * 1024 * 1024)))

    kernel = functools.partial(
        kolmogorov_bias_kernel,
        scale=-float(lambd) / float(beta),
        eps=float(epsilon),
        log_eps=float(math.log(float(epsilon))),
        use_gram=use_gram,
        mxu_dtype=mxu_dtype,
    )

    def run(single_buffer_weights):
        def wspec(shape):
            imap = lambda i: (0,) * len(shape)
            if single_buffer_weights:
                # Grid-invariant: fetched once; single buffer frees VMEM for a bigger TB.
                return pl.BlockSpec(shape, imap, pipeline_mode=pl.Buffered(1))
            return pl.BlockSpec(shape, imap)

        grid_spec = pl.GridSpec(
            grid=(NT,),
            in_specs=[
                pl.BlockSpec((TB, D), lambda i: (i, 0)),   # x: streamed over the batch
                wspec((D, Hp)),                            # W1^T: VMEM-resident
                wspec(mat.shape),                          # Gram / W1: VMEM-resident
                wspec((1, Hp)),                            # b1
                wspec((1, Hp)),                            # W2
                wspec((1, 1)),                             # b2
            ],
            out_specs=pl.BlockSpec((1, TB), lambda i: (0, i)),   # lane-dense bias rows
        )
        return pl.pallas_call(
            kernel,
            out_shape=jax.ShapeDtypeStruct((1, NT * TB), jnp.float32),
            grid_spec=grid_spec,
            compiler_params=pltpu.CompilerParams(
                dimension_semantics=("parallel",),          # shard batch tiles across TCs
                vmem_limit_bytes=vmem_limit),
        )(x, w1t, mat, b1p, w2p, b2p)

    if _BUFFERED_WEIGHTS_OK[0]:
        try:
            out = run(True)
        except Exception:                 # pl.Buffered(1) unsupported on this jax version
            _BUFFERED_WEIGHTS_OK[0] = False
            out = run(False)
    else:
        out = run(False)

    # PyTorch module returns shape (batch,); pad-row garbage columns are sliced off here.
    return out[0, :B]


def _reference(x, w1, b1, w2, b2, *, beta, lambd, epsilon):
    """Pure-JAX reference using autodiff (mirrors torch.autograd.grad), full f32 matmuls."""
    x = jnp.asarray(x, jnp.float32)
    hi = jax.lax.Precision.HIGHEST

    def q_fn(xi):
        h = jnp.tanh(jnp.dot(xi, w1.T, precision=hi) + b1)
        return jax.nn.sigmoid(jnp.dot(h, w2.T, precision=hi) + b2)[0]

    grads = jax.vmap(jax.grad(q_fn))(x)                       # (B, D)
    gsq = jnp.sum(grads ** 2, axis=1)                         # (B,)
    return -lambd * (1.0 / beta) * (jnp.log(gsq + epsilon) - jnp.log(epsilon))


if __name__ == "__main__":
    beta, lambd, epsilon = 2.5, 1.0, 1e-6
    key = jax.random.PRNGKey(0)

    # (B, D, H): tiny single-tile non-gram; padded-H single-tile non-gram;
    # multi-tile (2 grid steps, partial last block) gram path with D > Hp.
    configs = [
        (8, 16, 32),
        (20, 48, 32),
        (300, 192, 64),
    ]

    for ci, (B, D, H) in enumerate(configs):
        key, kx, k1, k2, k3, k4 = jax.random.split(key, 6)
        x = jax.random.normal(kx, (B, D), dtype=jnp.float32)
        w1 = 0.3 * jax.random.normal(k1, (H, D), dtype=jnp.float32)
        b1 = 0.1 * jax.random.normal(k2, (H,), dtype=jnp.float32)
        w2 = 0.3 * jax.random.normal(k3, (1, H), dtype=jnp.float32)
        b2 = 0.1 * jax.random.normal(k4, (1,), dtype=jnp.float32)

        ref = _reference(x, w1, b1, w2, b2, beta=beta, lambd=lambd, epsilon=epsilon)

        # f32 path
        bias = kolmogorov_bias(x, w1, b1, w2, b2, beta=beta, lambd=lambd, epsilon=epsilon)
        jax.block_until_ready(bias)
        assert bias.shape == (B,)
        assert jnp.allclose(bias, ref, rtol=5e-3, atol=5e-3), (bias, ref)

        # bf16 MXU operands (weights cast host-side, x cast in-VMEM); elementwise stays f32.
        bias_bf16 = kolmogorov_bias(x, w1, b1, w2, b2, beta=beta, lambd=lambd,
                                    epsilon=epsilon, matmul_dtype=jnp.bfloat16)
        jax.block_until_ready(bias_bf16)
        assert bias_bf16.shape == (B,)
        assert bool(jnp.all(jnp.isfinite(bias_bf16)))
        assert jnp.allclose(bias_bf16, ref, rtol=5e-2, atol=5e-2), (bias_bf16, ref)

        # x already stored in bf16 upstream (the case where bf16 actually halves HBM reads).
        if ci == len(configs) - 1:
            bias_xb = kolmogorov_bias(x.astype(jnp.bfloat16), w1, b1, w2, b2,
                                      beta=beta, lambd=lambd, epsilon=epsilon)
            jax.block_until_ready(bias_xb)
            assert bias_xb.shape == (B,)
            assert jnp.allclose(bias_xb, ref, rtol=5e-2, atol=5e-2), (bias_xb, ref)

    print("KERNEL_OK")
</pallas_src>

<mosaic_0001>
module attributes {stable_mosaic.version = 11 : i64} {
  func.func @kolmogorov_bias_kernel(%arg0: i32, %arg1: memref<8x16xf32, #tpu.memory_space<vmem>>, %arg2: memref<16x128xf32, #tpu.memory_space<vmem>>, %arg3: memref<128x16xf32, #tpu.memory_space<vmem>>, %arg4: memref<1x128xf32, #tpu.memory_space<vmem>>, %arg5: memref<1x128xf32, #tpu.memory_space<vmem>>, %arg6: memref<1x1xf32, #tpu.memory_space<vmem>>, %arg7: memref<1x8xf32, #tpu.memory_space<vmem>>) attributes {dimension_semantics = [#tpu.dimension_semantics<parallel>], iteration_bounds = array<i64: 1>, scalar_prefetch = 0 : i64, scratch_operands = 0 : i64, tpu.core_type = #tpu.core_type<tc>, window_params = [{transform_indices = @transform_0, window_bounds = array<i64: 8, 16>}, {pipeline_mode = #tpu.pipeline_mode<synchronous>, transform_indices = @transform_1, window_bounds = array<i64: 16, 128>}, {pipeline_mode = #tpu.pipeline_mode<synchronous>, transform_indices = @transform_2, window_bounds = array<i64: 128, 16>}, {pipeline_mode = #tpu.pipeline_mode<synchronous>, transform_indices = @transform_3, window_bounds = array<i64: 1, 128>}, {pipeline_mode = #tpu.pipeline_mode<synchronous>, transform_indices = @transform_4, window_bounds = array<i64: 1, 128>}, {pipeline_mode = #tpu.pipeline_mode<synchronous>, transform_indices = @transform_5, window_bounds = array<i64: 1, 1>}, {transform_indices = @transform_6, window_bounds = array<i64: 1, 8>}]} {
    %c0 = arith.constant 0 : index
    %c0_0 = arith.constant 0 : index
    %0 = vector.load %arg1[%c0, %c0_0] : memref<8x16xf32, #tpu.memory_space<vmem>>, vector<8x16xf32>
    %c0_1 = arith.constant 0 : index
    %c0_2 = arith.constant 0 : index
    %1 = vector.load %arg2[%c0_1, %c0_2] : memref<16x128xf32, #tpu.memory_space<vmem>>, vector<16x128xf32>
    %cst = arith.constant dense<0.000000e+00> : vector<8x128xf32>
    %2 = tpu.matmul %0, %1, %cst {dimension_numbers = #tpu.dot_dimension_numbers<[1], [0], [0], [1], [0, 0, 1, 1], [], []>} : vector<8x16xf32>, vector<16x128xf32>, vector<8x128xf32> -> vector<8x128xf32>
    %c0_3 = arith.constant 0 : index
    %c0_4 = arith.constant 0 : index
    %3 = vector.load %arg4[%c0_3, %c0_4] : memref<1x128xf32, #tpu.memory_space<vmem>>, vector<1x128xf32>
    %4 = vector.broadcast %3 : vector<1x128xf32> to vector<8x128xf32>
    %5 = arith.addf %2, %4 : vector<8x128xf32>
    %6 = math.tanh %5 : vector<8x128xf32>
    %c0_5 = arith.constant 0 : index
    %c0_6 = arith.constant 0 : index
    %7 = vector.load %arg5[%c0_5, %c0_6] : memref<1x128xf32, #tpu.memory_space<vmem>>, vector<1x128xf32>
    %8 = vector.broadcast %7 : vector<1x128xf32> to vector<8x128xf32>
    %9 = arith.mulf %6, %8 : vector<8x128xf32>
    %cst_7 = arith.constant dense<0.000000e+00> : vector<8xf32>
    %10 = vector.multi_reduction <add>, %9, %cst_7 [1] : vector<8x128xf32> to vector<8xf32>
    %11 = vector.shape_cast %10 : vector<8xf32> to vector<1x8xf32>
    %c0_8 = arith.constant 0 : index
    %c0_9 = arith.constant 0 : index
    %12 = vector.load %arg6[%c0_8, %c0_9] : memref<1x1xf32, #tpu.memory_space<vmem>>, vector<1x1xf32>
    %13 = vector.broadcast %12 : vector<1x1xf32> to vector<1x8xf32>
    %14 = arith.addf %11, %13 : vector<1x8xf32>
    %15 = arith.negf %14 : vector<1x8xf32>
    %16 = math.exp %15 : vector<1x8xf32>
    %cst_10 = arith.constant 1.000000e+00 : f32
    %17 = vector.broadcast %cst_10 : f32 to vector<1x8xf32>
    %18 = arith.addf %17, %16 : vector<1x8xf32>
    %19 = arith.divf %17, %18 : vector<1x8xf32>
    %cst_11 = arith.constant 1.000000e+00 : f32
    %20 = vector.broadcast %cst_11 : f32 to vector<1x8xf32>
    %21 = arith.subf %20, %19 : vector<1x8xf32>
    %22 = arith.mulf %19, %21 : vector<1x8xf32>
    %23 = arith.mulf %6, %6 : vector<8x128xf32>
    %cst_12 = arith.constant 1.000000e+00 : f32
    %24 = vector.broadcast %cst_12 : f32 to vector<8x128xf32>
    %25 = arith.subf %24, %23 : vector<8x128xf32>
    %26 = vector.broadcast %7 : vector<1x128xf32> to vector<8x128xf32>
    %27 = arith.mulf %26, %25 : vector<8x128xf32>
    %c0_13 = arith.constant 0 : index
    %c0_14 = arith.constant 0 : index
    %28 = vector.load %arg3[%c0_13, %c0_14] : memref<128x16xf32, #tpu.memory_space<vmem>>, vector<128x16xf32>
    %cst_15 = arith.constant dense<0.000000e+00> : vector<8x16xf32>
    %29 = tpu.matmul %27, %28, %cst_15 {dimension_numbers = #tpu.dot_dimension_numbers<[1], [0], [0], [1], [0, 0, 1, 1], [], []>} : vector<8x128xf32>, vector<128x16xf32>, vector<8x16xf32> -> vector<8x16xf32>
    %30 = arith.mulf %29, %29 : vector<8x16xf32>
    %cst_16 = arith.constant dense<0.000000e+00> : vector<8xf32>
    %31 = vector.multi_reduction <add>, %30, %cst_16 [1] : vector<8x16xf32> to vector<8xf32>
    %32 = vector.shape_cast %31 : vector<8xf32> to vector<1x8xf32>
    %cst_17 = arith.constant 0.000000e+00 : f32
    %33 = vector.broadcast %cst_17 : f32 to vector<1x8xf32>
    %34 = arith.maximumf %32, %33 : vector<1x8xf32>
    %35 = arith.mulf %22, %22 : vector<1x8xf32>
    %36 = arith.mulf %35, %34 : vector<1x8xf32>
    %cst_18 = arith.constant 9.99999997E-7 : f32
    %37 = vector.broadcast %cst_18 : f32 to vector<1x8xf32>
    %38 = arith.addf %36, %37 : vector<1x8xf32>
    %39 = math.log %38 : vector<1x8xf32>
    %cst_19 = arith.constant -13.8155107 : f32
    %40 = vector.broadcast %cst_19 : f32 to vector<1x8xf32>
    %41 = arith.subf %39, %40 : vector<1x8xf32>
    %cst_20 = arith.constant -4.000000e-01 : f32
    %42 = vector.broadcast %cst_20 : f32 to vector<1x8xf32>
    %43 = arith.mulf %42, %41 : vector<1x8xf32>
    %c0_21 = arith.constant 0 : index
    %c0_22 = arith.constant 0 : index
    %44 = vector.load %arg7[%c0_21, %c0_22] : memref<1x8xf32, #tpu.memory_space<vmem>>, vector<1x8xf32>
    tpu.vector_store %arg7[%c0_21, %c0_22], %43 {strides = array<i32>} : memref<1x8xf32, #tpu.memory_space<vmem>>, vector<1x8xf32>,
    return
  }
  func.func @transform_0(%arg0: i32) -> (i32, i32) {
    %c0_i32 = arith.constant 0 : i32
    %c0_i32_0 = arith.constant 0 : i32
    return %arg0, %c0_i32 : i32, i32
  }
  func.func @transform_1(%arg0: i32) -> (i32, i32) {
    %c0_i32 = arith.constant 0 : i32
    %c0_i32_0 = arith.constant 0 : i32
    %c0_i32_1 = arith.constant 0 : i32
    return %c0_i32, %c0_i32_0 : i32, i32
  }
  func.func @transform_2(%arg0: i32) -> (i32, i32) {
    %c0_i32 = arith.constant 0 : i32
    %c0_i32_0 = arith.constant 0 : i32
    %c0_i32_1 = arith.constant 0 : i32
    return %c0_i32, %c0_i32_0 : i32, i32
  }
  func.func @transform_3(%arg0: i32) -> (i32, i32) {
    %c0_i32 = arith.constant 0 : i32
    %c0_i32_0 = arith.constant 0 : i32
    %c0_i32_1 = arith.constant 0 : i32
    return %c0_i32, %c0_i32_0 : i32, i32
  }
  func.func @transform_4(%arg0: i32) -> (i32, i32) {
    %c0_i32 = arith.constant 0 : i32
    %c0_i32_0 = arith.constant 0 : i32
    %c0_i32_1 = arith.constant 0 : i32
    return %c0_i32, %c0_i32_0 : i32, i32
  }
  func.func @transform_5(%arg0: i32) -> (i32, i32) {
    %c0_i32 = arith.constant 0 : i32
    %c0_i32_0 = arith.constant 0 : i32
    %c0_i32_1 = arith.constant 0 : i32
    return %c0_i32, %c0_i32_0 : i32, i32
  }
  func.func @transform_6(%arg0: i32) -> (i32, i32) {
    %c0_i32 = arith.constant 0 : i32
    %c0_i32_0 = arith.constant 0 : i32
    return %c0_i32, %arg0 : i32, i32
  }
}

module attributes {stable_mosaic.version = 11 : i64} {
  func.func @kolmogorov_bias_kernel(%arg0: i32, %arg1: memref<8x16xf32, #tpu.memory_space<vmem>>, %arg2: memref<16x128xf32, #tpu.memory_space<vmem>>, %arg3: memref<128x16xf32, #tpu.memory_space<vmem>>, %arg4: memref<1x128xf32, #tpu.memory_space<vmem>>, %arg5: memref<1x128xf32, #tpu.memory_space<vmem>>, %arg6: memref<1x1xf32, #tpu.memory_space<vmem>>, %arg7: memref<1x8xf32, #tpu.memory_space<vmem>>) attributes {dimension_semantics = [#tpu.dimension_semantics<parallel>], iteration_bounds = array<i64: 1>, scalar_prefetch = 0 : i64, scratch_operands = 0 : i64, tpu.core_type = #tpu.core_type<tc>, window_params = [{transform_indices = @transform_0, window_bounds = array<i64: 8, 16>}, {pipeline_mode = #tpu.pipeline_mode<synchronous>, transform_indices = @transform_1, window_bounds = array<i64: 16, 128>}, {pipeline_mode = #tpu.pipeline_mode<synchronous>, transform_indices = @transform_2, window_bounds = array<i64: 128, 16>}, {pipeline_mode = #tpu.pipeline_mode<synchronous>, transform_indices = @transform_3, window_bounds = array<i64: 1, 128>}, {pipeline_mode = #tpu.pipeline_mode<synchronous>, transform_indices = @transform_4, window_bounds = array<i64: 1, 128>}, {pipeline_mode = #tpu.pipeline_mode<synchronous>, transform_indices = @transform_5, window_bounds = array<i64: 1, 1>}, {transform_indices = @transform_6, window_bounds = array<i64: 1, 8>}]} {
    %c0 = arith.constant 0 : index
    %c0_0 = arith.constant 0 : index
    %0 = vector.load %arg1[%c0, %c0_0] : memref<8x16xf32, #tpu.memory_space<vmem>>, vector<8x16xf32>
    %c0_1 = arith.constant 0 : index
    %c0_2 = arith.constant 0 : index
    %1 = vector.load %arg2[%c0_1, %c0_2] : memref<16x128xf32, #tpu.memory_space<vmem>>, vector<16x128xf32>
    %cst = arith.constant dense<0.000000e+00> : vector<8x128xf32>
    %2 = tpu.matmul %0, %1, %cst {dimension_numbers = #tpu.dot_dimension_numbers<[1], [0], [0], [1], [0, 0, 1, 1], [], []>} : vector<8x16xf32>, vector<16x128xf32>, vector<8x128xf32> -> vector<8x128xf32>
    %c0_3 = arith.constant 0 : index
    %c0_4 = arith.constant 0 : index
    %3 = vector.load %arg4[%c0_3, %c0_4] : memref<1x128xf32, #tpu.memory_space<vmem>>, vector<1x128xf32>
    %4 = vector.broadcast %3 : vector<1x128xf32> to vector<8x128xf32>
    %5 = arith.addf %2, %4 : vector<8x128xf32>
    %6 = math.tanh %5 : vector<8x128xf32>
    %c0_5 = arith.constant 0 : index
    %c0_6 = arith.constant 0 : index
    %7 = vector.load %arg5[%c0_5, %c0_6] : memref<1x128xf32, #tpu.memory_space<vmem>>, vector<1x128xf32>
    %8 = vector.broadcast %7 : vector<1x128xf32> to vector<8x128xf32>
    %9 = arith.mulf %6, %8 : vector<8x128xf32>
    %cst_7 = arith.constant dense<0.000000e+00> : vector<8xf32>
    %10 = vector.multi_reduction <add>, %9, %cst_7 [1] : vector<8x128xf32> to vector<8xf32>
    %11 = vector.shape_cast %10 : vector<8xf32> to vector<1x8xf32>
    %c0_8 = arith.constant 0 : index
    %c0_9 = arith.constant 0 : index
    %12 = vector.load %arg6[%c0_8, %c0_9] : memref<1x1xf32, #tpu.memory_space<vmem>>, vector<1x1xf32>
    %13 = vector.broadcast %12 : vector<1x1xf32> to vector<1x8xf32>
    %14 = arith.addf %11, %13 : vector<1x8xf32>
    %15 = arith.negf %14 : vector<1x8xf32>
    %16 = math.exp %15 : vector<1x8xf32>
    %cst_10 = arith.constant 1.000000e+00 : f32
    %17 = vector.broadcast %cst_10 : f32 to vector<1x8xf32>
    %18 = arith.addf %17, %16 : vector<1x8xf32>
    %19 = arith.divf %17, %18 : vector<1x8xf32>
    %cst_11 = arith.constant 1.000000e+00 : f32
    %20 = vector.broadcast %cst_11 : f32 to vector<1x8xf32>
    %21 = arith.subf %20, %19 : vector<1x8xf32>
    %22 = arith.mulf %19, %21 : vector<1x8xf32>
    %23 = arith.mulf %6, %6 : vector<8x128xf32>
    %cst_12 = arith.constant 1.000000e+00 : f32
    %24 = vector.broadcast %cst_12 : f32 to vector<8x128xf32>
    %25 = arith.subf %24, %23 : vector<8x128xf32>
    %26 = vector.broadcast %7 : vector<1x128xf32> to vector<8x128xf32>
    %27 = arith.mulf %26, %25 : vector<8x128xf32>
    %c0_13 = arith.constant 0 : index
    %c0_14 = arith.constant 0 : index
    %28 = vector.load %arg3[%c0_13, %c0_14] : memref<128x16xf32, #tpu.memory_space<vmem>>, vector<128x16xf32>
    %cst_15 = arith.constant dense<0.000000e+00> : vector<8x16xf32>
    %29 = tpu.matmul %27, %28, %cst_15 {dimension_numbers = #tpu.dot_dimension_numbers<[1], [0], [0], [1], [0, 0, 1, 1], [], []>} : vector<8x128xf32>, vector<128x16xf32>, vector<8x16xf32> -> vector<8x16xf32>
    %30 = arith.mulf %29, %29 : vector<8x16xf32>
    %cst_16 = arith.constant dense<0.000000e+00> : vector<8xf32>
    %31 = vector.multi_reduction <add>, %30, %cst_16 [1] : vector<8x16xf32> to vector<8xf32>
    %32 = vector.shape_cast %31 : vector<8xf32> to vector<1x8xf32>
    %cst_17 = arith.constant 0.000000e+00 : f32
    %33 = vector.broadcast %cst_17 : f32 to vector<1x8xf32>
    %34 = arith.maximumf %32, %33 : vector<1x8xf32>
    %35 = arith.mulf %22, %22 : vector<1x8xf32>
    %36 = arith.mulf %35, %34 : vector<1x8xf32>
    %cst_18 = arith.constant 9.99999997E-7 : f32
    %37 = vector.broadcast %cst_18 : f32 to vector<1x8xf32>
    %38 = arith.addf %36, %37 : vector<1x8xf32>
    %39 = math.log %38 : vector<1x8xf32>
    %cst_19 = arith.constant -13.8155107 : f32
    %40 = vector.broadcast %cst_19 : f32 to vector<1x8xf32>
    %41 = arith.subf %39, %40 : vector<1x8xf32>
    %cst_20 = arith.constant -4.000000e-01 : f32
    %42 = vector.broadcast %cst_20 : f32 to vector<1x8xf32>
    %43 = arith.mulf %42, %41 : vector<1x8xf32>
    %c0_21 = arith.constant 0 : index
    %c0_22 = arith.constant 0 : index
    %44 = vector.load %arg7[%c0_21, %c0_22] : memref<1x8xf32, #tpu.memory_space<vmem>>, vector<1x8xf32>
    tpu.vector_store %arg7[%c0_21, %c0_22], %43 {strides = array<i32>} : memref<1x8xf32, #tpu.memory_space<vmem>>, vector<1x8xf32>,
    return
  }
  func.func @transform_0(%arg0: i32) -> (i32, i32) {
    %c0_i32 = arith.constant 0 : i32
    %c0_i32_0 = arith.constant 0 : i32
    return %arg0, %c0_i32 : i32, i32
  }
  func.func @transform_1(%arg0: i32) -> (i32, i32) {
    %c0_i32 = arith.constant 0 : i32
    %c0_i32_0 = arith.constant 0 : i32
    %c0_i32_1 = arith.constant 0 : i32
    return %c0_i32, %c0_i32_0 : i32, i32
  }
  func.func @transform_2(%arg0: i32) -> (i32, i32) {
    %c0_i32 = arith.constant 0 : i32
    %c0_i32_0 = arith.constant 0 : i32
    %c0_i32_1 = arith.constant 0 : i32
    return %c0_i32, %c0_i32_0 : i32, i32
  }
  func.func @transform_3(%arg0: i32) -> (i32, i32) {
    %c0_i32 = arith.constant 0 : i32
    %c0_i32_0 = arith.constant 0 : i32
    %c0_i32_1 = arith.constant 0 : i32
    return %c0_i32, %c0_i32_0 : i32, i32
  }
  func.func @transform_4(%arg0: i32) -> (i32, i32) {
    %c0_i32 = arith.constant 0 : i32
    %c0_i32_0 = arith.constant 0 : i32
    %c0_i32_1 = arith.constant 0 : i32
    return %c0_i32, %c0_i32_0 : i32, i32
  }
  func.func @transform_5(%arg0: i32) -> (i32, i32) {
    %c0_i32 = arith.constant 0 : i32
    %c0_i32_0 = arith.constant 0 : i32
    %c0_i32_1 = arith.constant 0 : i32
    return %c0_i32, %c0_i32_0 : i32, i32
  }
  func.func @transform_6(%arg0: i32) -> (i32, i32) {
    %c0_i32 = arith.constant 0 : i32
    %c0_i32_0 = arith.constant 0 : i32
    return %c0_i32, %arg0 : i32, i32
  }
}

</mosaic_0001>

<llo_original>
// kernel: tpu_custom_call.1
$region0: #{tpu_custom_call.1}
  #allocation0 [shape = 'u32[]', space=smem, size = 0x4, offset = 0x4, fixed_abs, tag = 'smem constant byte address 0x4 - core index']
  #allocation1 [shape = 'u32[72,128]{1,0:T(1,128)}', space=vmem, size = 0x9000, scoped, tag = 'internal scratch']
  #allocation2 [shape = 'f32[1,1]{1,0:T(1,128)S(1)}', space=vmem, size = 0x200, scoped, tag = 'scoped memory for tpu_custom_call.1']
  %s0 = inlined_call_operand.vmem [shape: f32[8,16], index: 0, kind: input, shape index: {}]
  %s1 = inlined_call_operand.vmem [shape: f32[16,128], index: 1, kind: input, shape index: {}]
  %s2 = inlined_call_operand.vmem [shape: f32[128,16], index: 2, kind: input, shape index: {}]
  %s3 = inlined_call_operand.vmem [shape: f32[1,128], index: 3, kind: input, shape index: {}]
  %s4 = inlined_call_operand.vmem [shape: f32[1,128], index: 4, kind: input, shape index: {}]
  %s5 = inlined_call_operand.<no memory space> [shape: f32[1,1], index: 5, kind: input, shape index: {}]
  %s6 = inlined_call_operand.hbm [shape: f32[1,8], index: 6, kind: output, shape index: {}]
  %s7 = sld [smem:[#allocation0]]
  $region34: #{tpu_custom_call.1} parent=0
    _
  %s9 = ssub.s32 1, %s7
  %s10 = scalar_select 0, %s9, %s7
  %v11 = vstv %s5
  %12 = vst [vmem:[#allocation2] sm:$0x1] %v11
  $region1: #{tpu_custom_call.1} parent=0
    #allocation3 [shape = 'u8[512]{0}', space=vmem, size = 0x400, scoped, tag = 'output window, operand 0, single buffered']
    #allocation4 [shape = 's32[1]{0}', space=sflag, size = 0x4, scoped, tag = 'scoped memory for tpu_custom_call.1']
    %13 = vsyncpa [#allocation4], 0
    // Predicated region
    $region2: #{tpu_custom_call.1} parent=1 // pred_check
      _
    $region3: #{tpu_custom_call.1} parent=1 // pred_check_branch
      %15 = sbr.rel (0) target = $region5
    $region4: #{tpu_custom_call.1} parent=1 // pred_region
      _
    $region5: #{tpu_custom_call.1} parent=1 // pred_fallthru
      _
    // Predicated region
    $region6: #{tpu_custom_call.1} parent=1 // pred_check
      _
    $region7: #{tpu_custom_call.1} parent=1 // pred_check_branch
      %17 = sbr.rel (0) target = $region9
    $region8: #{tpu_custom_call.1} parent=1 // pred_region
      _
    $region9: #{tpu_custom_call.1} parent=1 // pred_fallthru
      _
    // Predicated region
    $region10: #{tpu_custom_call.1} parent=1 // pred_check
      _
    $region11: #{tpu_custom_call.1} parent=1 // pred_check_branch
      %19 = sbr.rel (0) target = $region13
    $region12: #{tpu_custom_call.1} parent=1 // pred_region
      _
    $region13: #{tpu_custom_call.1} parent=1 // pred_fallthru
      _
    // Predicated region
    $region14: #{tpu_custom_call.1} parent=1 // pred_check
      _
    $region15: #{tpu_custom_call.1} parent=1 // pred_check_branch
      %21 = sbr.rel (0) target = $region17
    $region16: #{tpu_custom_call.1} parent=1 // pred_region
      _
    $region17: #{tpu_custom_call.1} parent=1 // pred_fallthru
      _
    // Predicated region
    $region18: #{tpu_custom_call.1} parent=1 // pred_check
      _
    $region19: #{tpu_custom_call.1} parent=1 // pred_check_branch
      %23 = sbr.rel (0) target = $region21
    $region20: #{tpu_custom_call.1} parent=1 // pred_region
      _
    $region21: #{tpu_custom_call.1} parent=1 // pred_fallthru
      _
    // Predicated region
    $region22: #{tpu_custom_call.1} parent=1 // pred_check
      _
    $region23: #{tpu_custom_call.1} parent=1 // pred_check_branch
      %25 = sbr.rel (0) target = $region25
    $region24: #{tpu_custom_call.1} parent=1 // pred_region
      _
    $region25: #{tpu_custom_call.1} parent=1 // pred_fallthru
      _
    %v26 = vld [vmem:[%s0] sm:$0xff]
    %v27 = vld [vmem:[%s1] sm:$0xff]
    %v28 = vld [vmem:[%s1 + $0x8] sm:$0xff]
    %v29 = vld [vmem:[%s3] sm:$0x1]
    %v31 = vperm.slane %v29, 0
    %vm33 = vcmask 130048
    %v35 = vsel %vm33, %v26, 0
    %37 = vmatpush.msra.mxu0 0.0
    %38 = vmatpush.msra.mxu0 0.0
    %39 = vmatpush.msra.mxu0 0.0
    %40 = vmatpush.msra.mxu0 0.0
    %41 = vmatpush.msra.mxu0 0.0
    %42 = vmatpush.msra.mxu0 0.0
    %43 = vmatpush.msra.mxu0 0.0
    %44 = vmatpush.msra.mxu0 0.0
    %45 = vmatpush.msra.mxu0 0.0
    %46 = vmatpush.msra.mxu0 0.0
    %47 = vmatpush.msra.mxu0 0.0
    %48 = vmatpush.msra.mxu0 0.0
    %49 = vmatpush.msra.mxu0 0.0
    %50 = vmatpush.msra.mxu0 0.0
    %51 = vmatpush.msra.mxu0 %v28
    %52 = vmatpush.msra.mxu0 %v27
    %53 = vmatmul.f32.gmra.mxu0 %v35
    %v54 = vpop.f32.mrf.mxu0
    %v55 = vadd.f32 %v31, %v54
    %56 = vdwg.mxu0
    %v57 = vtanh.pop %v55
    %v58 = vld [vmem:[%s4] sm:$0x1]
    %v60 = vperm.slane %v58, 0
    %v62 = vmul.f32 %v57, %v60
    %63 = vadd.xlane.f32.xlu0 %v62
    %v64 = vpop.xlane.xlu0 %63
    %v65 = vld [vmem:[#allocation2] sm:$0x1]
    %67 = vset.pattern.permute.xlu0 0
    %68 = vperm.xlu0 %67, %v65
    %v69 = vpop.permute.xlu0 %68
    %v71 = vperm.slane %v69, 0
    %v72 = vadd.f32 %v64, %v71
    %v73 = vxor.u32 %v72, 2147483648
    %v74 = vmul.f32 %v73, 1.442695
    %v75 = vpow.pop %v74
    %v76 = vadd.f32 %v75, 1.0
    %v77 = vrcp.pop %v76
    %v78 = vmul.f32 %v76, %v77
    %v79 = vsub.f32 1.0, %v78
    %v80 = vmul.f32 %v77, %v79
    %v81 = vadd.f32 %v77, %v80
    %vm82 = vweird.f32 %v76
    %vm83 = vweird.f32 %v77
    %vm84 = vmor %vm82, %vm83
    %v85 = vsel %vm84, %v77, %v81
    %v86 = vand.u32 2147483647, %v76
    %vm87 = vcmp.eq.f32.partialorder %v86, 8.507059e+37
    %v88 = vand.u32 %v76, 2147483648
    %v89 = vor.u32 1.1754944e-38, %v88
    %v90 = vsel %vm87, %v89, %v85
    %v91 = vmul.f32 1.0, %v90
    %v92 = vsub.f32 1.0, %v91
    %v93 = vmul.f32 %v91, %v92
    %v94 = vmul.f32 %v57, %v57
    %v95 = vsub.f32 1.0, %v94
    %v96 = vmul.f32 %v60, %v95
    %v97 = vld [vmem:[%s2] sm:$0xff]
    %v98 = vld [vmem:[%s2 + $0x8] sm:$0xff]
    %v99 = vld [vmem:[%s2 + $0x10] sm:$0xff]
    %v100 = vld [vmem:[%s2 + $0x18] sm:$0xff]
    %v101 = vld [vmem:[%s2 + $0x20] sm:$0xff]
    %v102 = vld [vmem:[%s2 + $0x28] sm:$0xff]
    %v103 = vld [vmem:[%s2 + $0x30] sm:$0xff]
    %v104 = vld [vmem:[%s2 + $0x38] sm:$0xff]
    %v105 = vld [vmem:[%s2 + $0x40] sm:$0xff]
    %v106 = vld [vmem:[%s2 + $0x48] sm:$0xff]
    %v107 = vld [vmem:[%s2 + $0x50] sm:$0xff]
    %v108 = vld [vmem:[%s2 + $0x58] sm:$0xff]
    %v109 = vld [vmem:[%s2 + $0x60] sm:$0xff]
    %v110 = vld [vmem:[%s2 + $0x68] sm:$0xff]
    %v111 = vld [vmem:[%s2 + $0x70] sm:$0xff]
    %v112 = vld [vmem:[%s2 + $0x78] sm:$0xff]
    %113 = vmatpush.msra.mxu0 %v112
    %114 = vmatpush.msra.mxu0 %v111
    %115 = vmatpush.msra.mxu0 %v110
    %116 = vmatpush.msra.mxu0 %v109
    %117 = vmatpush.msra.mxu0 %v108
    %118 = vmatpush.msra.mxu0 %v107
    %119 = vmatpush.msra.mxu0 %v106
    %120 = vmatpush.msra.mxu0 %v105
    %121 = vmatpush.msra.mxu0 %v104
    %122 = vmatpush.msra.mxu0 %v103
    %123 = vmatpush.msra.mxu0 %v102
    %124 = vmatpush.msra.mxu0 %v101
    %125 = vmatpush.msra.mxu0 %v100
    %126 = vmatpush.msra.mxu0 %v99
    %127 = vmatpush.msra.mxu0 %v98
    %128 = vmatpush.msra.mxu0 %v97
    %129 = vmatmul.f32.gmra.mxu0 %v96
    %v130 = vpop.f32.mrf.mxu0
    %v131 = vadd.f32 0.0, %v130
    %132 = vdwg.mxu0
    %v133 = vmul.f32 %v131, %v131
    %v134 = vsel %vm33, %v133, 0.0
    %135 = vadd.xlane.f32.xlu0 %v134
    %v136 = vpop.xlane.xlu0 %135
    %v137 = vmax.f32 %v136, 0.0
    %v138 = vmul.f32 %v93, %v93
    %v139 = vmul.f32 %v138, %v137
    %v140 = vadd.f32 %v139, 1e-06
    %v141 = vlog2.pop %v140
    %v142 = vmul.f32 %v141, 0.6931472
    %v143 = vsub.f32 %v142, -13.815511
    %v144 = vmul.f32 %v143, -0.4
    %v146 = vlaneseq
    %v147 = vand.u32 %v146, 127
    %v148 = vperm.slane %v144, %v147
    %vm150 = vcmask 57344
    %151 = vst.msk [vmem:[#allocation3] sm:$0x1] %vm150, %v148
    // Predicated region
    $region26: #{tpu_custom_call.1} parent=1 // pred_check
      _
    $region27: #{tpu_custom_call.1} parent=1 // pred_check_branch
      %153 = sbr.rel (0) target = $region29
    $region28: #{tpu_custom_call.1} parent=1 // pred_region
      %155 = vsyncadd [#allocation4], 0
      %s157 = sshll.u32 [#allocation3], 4
      %s158 = int_to_ptr.vmem [resolvable:$true] %s157
      %s159 = sshll.u32 %s6, 4
      %s160 = int_to_ptr.hbm [resolvable:$true] %s159
      %162 = dma.vmem_to_hbm [thread:$0]  %s158, 16, %s160, [#allocation4]
    $region29: #{tpu_custom_call.1} parent=1 // pred_fallthru
      _
    // Predicated region
    $region30: #{tpu_custom_call.1} parent=1 // pred_check
      _
    $region31: #{tpu_custom_call.1} parent=1 // pred_check_branch
      %164 = sbr.rel (0) target = $region33
    $region32: #{tpu_custom_call.1} parent=1 // pred_region
      %166 = dma.done [#allocation4], 16
    $region33: #{tpu_custom_call.1} parent=1 // pred_fallthru
      _
    %167 = vsyncpa [#allocation4], 1

// kernel: tpu_custom_call.1
$region0: #{tpu_custom_call.1}
  #allocation0 [shape = 'u32[]', space=smem, size = 0x4, offset = 0x4, fixed_abs, tag = 'smem constant byte address 0x4 - core index']
  #allocation1 [shape = 'u32[72,128]{1,0:T(1,128)}', space=vmem, size = 0x9000, scoped, tag = 'internal scratch']
  #allocation2 [shape = 'f32[1,1]{1,0:T(1,128)S(1)}', space=vmem, size = 0x200, scoped, tag = 'scoped memory for tpu_custom_call.1']
  %s0 = inlined_call_operand.vmem [shape: f32[8,16], index: 0, kind: input, shape index: {}]
  %s1 = inlined_call_operand.vmem [shape: f32[16,128], index: 1, kind: input, shape index: {}]
  %s2 = inlined_call_operand.vmem [shape: f32[128,16], index: 2, kind: input, shape index: {}]
  %s3 = inlined_call_operand.vmem [shape: f32[1,128], index: 3, kind: input, shape index: {}]
  %s4 = inlined_call_operand.vmem [shape: f32[1,128], index: 4, kind: input, shape index: {}]
  %s5 = inlined_call_operand.<no memory space> [shape: f32[1,1], index: 5, kind: input, shape index: {}]
  %s6 = inlined_call_operand.hbm [shape: f32[1,8], index: 6, kind: output, shape index: {}]
  %s7 = sld [smem:[#allocation0]]
  $region34: #{tpu_custom_call.1} parent=0
    _
  %s9 = ssub.s32 1, %s7
  %s10 = scalar_select 0, %s9, %s7
  %v11 = vstv %s5
  %12 = vst [vmem:[#allocation2] sm:$0x1] %v11
  $region1: #{tpu_custom_call.1} parent=0
    #allocation3 [shape = 'u8[512]{0}', space=vmem, size = 0x400, scoped, tag = 'output window, operand 0, single buffered']
    #allocation4 [shape = 's32[1]{0}', space=sflag, size = 0x4, scoped, tag = 'scoped memory for tpu_custom_call.1']
    %13 = vsyncpa [#allocation4], 0
    // Predicated region
    $region2: #{tpu_custom_call.1} parent=1 // pred_check
      _
    $region3: #{tpu_custom_call.1} parent=1 // pred_check_branch
      %15 = sbr.rel (0) target = $region5
    $region4: #{tpu_custom_call.1} parent=1 // pred_region
      _
    $region5: #{tpu_custom_call.1} parent=1 // pred_fallthru
      _
    // Predicated region
    $region6: #{tpu_custom_call.1} parent=1 // pred_check
      _
    $region7: #{tpu_custom_call.1} parent=1 // pred_check_branch
      %17 = sbr.rel (0) target = $region9
    $region8: #{tpu_custom_call.1} parent=1 // pred_region
      _
    $region9: #{tpu_custom_call.1} parent=1 // pred_fallthru
      _
    // Predicated region
    $region10: #{tpu_custom_call.1} parent=1 // pred_check
      _
    $region11: #{tpu_custom_call.1} parent=1 // pred_check_branch
      %19 = sbr.rel (0) target = $region13
    $region12: #{tpu_custom_call.1} parent=1 // pred_region
      _
    $region13: #{tpu_custom_call.1} parent=1 // pred_fallthru
      _
    // Predicated region
    $region14: #{tpu_custom_call.1} parent=1 // pred_check
      _
    $region15: #{tpu_custom_call.1} parent=1 // pred_check_branch
      %21 = sbr.rel (0) target = $region17
    $region16: #{tpu_custom_call.1} parent=1 // pred_region
      _
    $region17: #{tpu_custom_call.1} parent=1 // pred_fallthru
      _
    // Predicated region
    $region18: #{tpu_custom_call.1} parent=1 // pred_check
      _
    $region19: #{tpu_custom_call.1} parent=1 // pred_check_branch
      %23 = sbr.rel (0) target = $region21
    $region20: #{tpu_custom_call.1} parent=1 // pred_region
      _
    $region21: #{tpu_custom_call.1} parent=1 // pred_fallthru
      _
    // Predicated region
    $region22: #{tpu_custom_call.1} parent=1 // pred_check
      _
    $region23: #{tpu_custom_call.1} parent=1 // pred_check_branch
      %25 = sbr.rel (0) target = $region25
    $region24: #{tpu_custom_call.1} parent=1 // pred_region
      _
    $region25: #{tpu_custom_call.1} parent=1 // pred_fallthru
      _
    %v26 = vld [vmem:[%s0] sm:$0xff]
    %v27 = vld [vmem:[%s1] sm:$0xff]
    %v28 = vld [vmem:[%s1 + $0x8] sm:$0xff]
    %v29 = vld [vmem:[%s3] sm:$0x1]
    %v31 = vperm.slane %v29, 0
    %vm33 = vcmask 130048
    %v35 = vsel %vm33, %v26, 0
    %37 = vmatpush.msra.mxu0 0.0
    %38 = vmatpush.msra.mxu0 0.0
    %39 = vmatpush.msra.mxu0 0.0
    %40 = vmatpush.msra.mxu0 0.0
    %41 = vmatpush.msra.mxu0 0.0
    %42 = vmatpush.msra.mxu0 0.0
    %43 = vmatpush.msra.mxu0 0.0
    %44 = vmatpush.msra.mxu0 0.0
    %45 = vmatpush.msra.mxu0 0.0
    %46 = vmatpush.msra.mxu0 0.0
    %47 = vmatpush.msra.mxu0 0.0
    %48 = vmatpush.msra.mxu0 0.0
    %49 = vmatpush.msra.mxu0 0.0
    %50 = vmatpush.msra.mxu0 0.0
    %51 = vmatpush.msra.mxu0 %v28
    %52 = vmatpush.msra.mxu0 %v27
    %53 = vmatmul.f32.gmra.mxu0 %v35
    %v54 = vpop.f32.mrf.mxu0
    %v55 = vadd.f32 %v31, %v54
    %56 = vdwg.mxu0
    %v57 = vtanh.pop %v55
    %v58 = vld [vmem:[%s4] sm:$0x1]
    %v60 = vperm.slane %v58, 0
    %v62 = vmul.f32 %v57, %v60
    %63 = vadd.xlane.f32.xlu0 %v62
    %v64 = vpop.xlane.xlu0 %63
    %v65 = vld [vmem:[#allocation2] sm:$0x1]
    %67 = vset.pattern.permute.xlu0 0
    %68 = vperm.xlu0 %67, %v65
    %v69 = vpop.permute.xlu0 %68
    %v71 = vperm.slane %v69, 0
    %v72 = vadd.f32 %v64, %v71
    %v73 = vxor.u32 %v72, 2147483648
    %v74 = vmul.f32 %v73, 1.442695
    %v75 = vpow.pop %v74
    %v76 = vadd.f32 %v75, 1.0
    %v77 = vrcp.pop %v76
    %v78 = vmul.f32 %v76, %v77
    %v79 = vsub.f32 1.0, %v78
    %v80 = vmul.f32 %v77, %v79
    %v81 = vadd.f32 %v77, %v80
    %vm82 = vweird.f32 %v76
    %vm83 = vweird.f32 %v77
    %vm84 = vmor %vm82, %vm83
    %v85 = vsel %vm84, %v77, %v81
    %v86 = vand.u32 2147483647, %v76
    %vm87 = vcmp.eq.f32.partialorder %v86, 8.507059e+37
    %v88 = vand.u32 %v76, 2147483648
    %v89 = vor.u32 1.1754944e-38, %v88
    %v90 = vsel %vm87, %v89, %v85
    %v91 = vmul.f32 1.0, %v90
    %v92 = vsub.f32 1.0, %v91
    %v93 = vmul.f32 %v91, %v92
    %v94 = vmul.f32 %v57, %v57
    %v95 = vsub.f32 1.0, %v94
    %v96 = vmul.f32 %v60, %v95
    %v97 = vld [vmem:[%s2] sm:$0xff]
    %v98 = vld [vmem:[%s2 + $0x8] sm:$0xff]
    %v99 = vld [vmem:[%s2 + $0x10] sm:$0xff]
    %v100 = vld [vmem:[%s2 + $0x18] sm:$0xff]
    %v101 = vld [vmem:[%s2 + $0x20] sm:$0xff]
    %v102 = vld [vmem:[%s2 + $0x28] sm:$0xff]
    %v103 = vld [vmem:[%s2 + $0x30] sm:$0xff]
    %v104 = vld [vmem:[%s2 + $0x38] sm:$0xff]
    %v105 = vld [vmem:[%s2 + $0x40] sm:$0xff]
    %v106 = vld [vmem:[%s2 + $0x48] sm:$0xff]
    %v107 = vld [vmem:[%s2 + $0x50] sm:$0xff]
    %v108 = vld [vmem:[%s2 + $0x58] sm:$0xff]
    %v109 = vld [vmem:[%s2 + $0x60] sm:$0xff]
    %v110 = vld [vmem:[%s2 + $0x68] sm:$0xff]
    %v111 = vld [vmem:[%s2 + $0x70] sm:$0xff]
    %v112 = vld [vmem:[%s2 + $0x78] sm:$0xff]
    %113 = vmatpush.msra.mxu0 %v112
    %114 = vmatpush.msra.mxu0 %v111
    %115 = vmatpush.msra.mxu0 %v110
    %116 = vmatpush.msra.mxu0 %v109
    %117 = vmatpush.msra.mxu0 %v108
    %118 = vmatpush.msra.mxu0 %v107
    %119 = vmatpush.msra.mxu0 %v106
    %120 = vmatpush.msra.mxu0 %v105
    %121 = vmatpush.msra.mxu0 %v104
    %122 = vmatpush.msra.mxu0 %v103
    %123 = vmatpush.msra.mxu0 %v102
    %124 = vmatpush.msra.mxu0 %v101
    %125 = vmatpush.msra.mxu0 %v100
    %126 = vmatpush.msra.mxu0 %v99
    %127 = vmatpush.msra.mxu0 %v98
    %128 = vmatpush.msra.mxu0 %v97
    %129 = vmatmul.f32.gmra.mxu0 %v96
    %v130 = vpop.f32.mrf.mxu0
    %v131 = vadd.f32 0.0, %v130
    %132 = vdwg.mxu0
    %v133 = vmul.f32 %v131, %v131
    %v134 = vsel %vm33, %v133, 0.0
    %135 = vadd.xlane.f32.xlu0 %v134
    %v136 = vpop.xlane.xlu0 %135
    %v137 = vmax.f32 %v136, 0.0
    %v138 = vmul.f32 %v93, %v93
    %v139 = vmul.f32 %v138, %v137
    %v140 = vadd.f32 %v139, 1e-06
    %v141 = vlog2.pop %v140
    %v142 = vmul.f32 %v141, 0.6931472
    %v143 = vsub.f32 %v142, -13.815511
    %v144 = vmul.f32 %v143, -0.4
    %v146 = vlaneseq
    %v147 = vand.u32 %v146, 127
    %v148 = vperm.slane %v144, %v147
    %vm150 = vcmask 57344
    %151 = vst.msk [vmem:[#allocation3] sm:$0x1] %vm150, %v148
    // Predicated region
    $region26: #{tpu_custom_call.1} parent=1 // pred_check
      _
    $region27: #{tpu_custom_call.1} parent=1 // pred_check_branch
      %153 = sbr.rel (0) target = $region29
    $region28: #{tpu_custom_call.1} parent=1 // pred_region
      %155 = vsyncadd [#allocation4], 0
      %s157 = sshll.u32 [#allocation3], 4
      %s158 = int_to_ptr.vmem [resolvable:$true] %s157
      %s159 = sshll.u32 %s6, 4
      %s160 = int_to_ptr.hbm [resolvable:$true] %s159
      %162 = dma.vmem_to_hbm [thread:$0]  %s158, 16, %s160, [#allocation4]
    $region29: #{tpu_custom_call.1} parent=1 // pred_fallthru
      _
    // Predicated region
    $region30: #{tpu_custom_call.1} parent=1 // pred_check
      _
    $region31: #{tpu_custom_call.1} parent=1 // pred_check_branch
      %164 = sbr.rel (0) target = $region33
    $region32: #{tpu_custom_call.1} parent=1 // pred_region
      %166 = dma.done [#allocation4], 16
    $region33: #{tpu_custom_call.1} parent=1 // pred_fallthru
      _
    %167 = vsyncpa [#allocation4], 1

</llo_original>
